<compile_context>
chip_gen: v6e
topology: v6e:2x2x1
jax: 0.10.0
libtpu: 0.0.40
codegen_flags: <defaults>
</compile_context>

<pallas_src>
import jax
import jax.numpy as jnp
from jax.experimental import pallas as pl
from jax.experimental.pallas import tpu as pltpu

_LANE = 128
_MIN_ROWS = 32  # 4 (8,128) sub-accumulator vregs; also the int8 sublane tile.


def _dice_sums_kernel(x_ref, t_ref, out_ref):
    """Streams (br, 128) row-tiles of the flattened inputs.

    Grid = (ncores, nblk_per_core): axis 0 is the per-core split ("parallel"),
    axis 1 streams that core's row-tiles ("arbitrary").

    out_ref block = (1, 2, 32, 128) f32, resident across axis 1:
      slot 0: intersection partials  sum(sigmoid(x) * t)
      slot 1: S+T partials           sum(sigmoid(x)) + sum(t)
    Cross-lane reduction of the (32,128) slabs happens in the wrapper.
    """
    i = pl.program_id(1)

    @pl.when(i == 0)
    def _init():
        out_ref[...] = jnp.zeros_like(out_ref)

    x = x_ref[...].astype(jnp.float32)
    t = t_ref[...].astype(jnp.float32)
    # sigmoid(x) == 0.5 * tanh(0.5 * x) + 0.5  -> single EUP (tanh) push.
    s = 0.5 * jnp.tanh(0.5 * x) + 0.5

    br = x.shape[0]
    s3 = s.reshape(br // _MIN_ROWS, _MIN_ROWS, _LANE)
    t3 = t.reshape(br // _MIN_ROWS, _MIN_ROWS, _LANE)

    # Pure VPU vreg adds; the (32,128) result spans 4 vregs -> 4 independent
    # accumulation chains across the 4 VALU slots.
    out_ref[0, 0] += jnp.sum(s3 * t3, axis=0)   # intersection partials
    out_ref[0, 1] += jnp.sum(s3 + t3, axis=0)   # sum(sigmoid) + sum(target)


def dice_loss(x, target, smooth=1.0, block_rows=4096, ncores=2):
    """Pallas implementation of Dice_Loss.forward for any matching shapes."""
    assert x.shape == target.shape
    n = int(x.size)

    xf = x.reshape(-1)
    tf = target.reshape(-1)

    # --- tiling ----------------------------------------------------------
    rows_needed = int(pl.cdiv(n, _LANE))
    rows_aligned = int(pl.cdiv(rows_needed, _MIN_ROWS)) * _MIN_ROWS
    br = (min(int(block_rows), rows_aligned) // _MIN_ROWS) * _MIN_ROWS
    br = max(br, _MIN_ROWS)                     # multiple of 32, >= 32
    nblk_total = int(pl.cdiv(rows_aligned, br))
    ncores = max(1, int(ncores))
    nblk_per_core = int(pl.cdiv(nblk_total, ncores))
    rows_total = ncores * nblk_per_core * br    # full grid extent in rows

    # Zero-pad to the full grid extent (no OOB DMA, no in-kernel masking).
    pad = rows_total * _LANE - n
    if pad:
        xf = jnp.pad(xf, (0, pad))
        tf = jnp.pad(tf, (0, pad))
    x2 = xf.reshape(rows_total, _LANE)
    t2 = tf.reshape(rows_total, _LANE)

    # --- pallas_call ------------------------------------------------------
    tile_spec = pl.BlockSpec((br, _LANE), lambda c, i: (c * nblk_per_core + i, 0))
    out_spec = pl.BlockSpec((1, 2, _MIN_ROWS, _LANE), lambda c, i: (c, 0, 0, 0))

    partials = pl.pallas_call(
        _dice_sums_kernel,
        out_shape=jax.ShapeDtypeStruct((ncores, 2, _MIN_ROWS, _LANE), jnp.float32),
        grid_spec=pltpu.PrefetchScalarGridSpec(
            num_scalar_prefetch=0,
            grid=(ncores, nblk_per_core),
            in_specs=[tile_spec, tile_spec],
            out_specs=out_spec,
        ),
        compiler_params=pltpu.CompilerParams(
            dimension_semantics=("parallel", "arbitrary")),
    )(x2, t2)

    # Tiny final reductions + padding correction in the wrapper.
    inter = jnp.sum(partials[:, 0])
    # Padded logits are 0 -> each contributes sigmoid(0)=0.5 to S and 0 to T
    # and 0 to the intersection; only S+T needs correcting.
    st = jnp.sum(partials[:, 1]) - 0.5 * jnp.float32(pad)
    smooth = jnp.float32(smooth)
    return 1.0 - (2.0 * inter + smooth) / (st + smooth)


if __name__ == "__main__":
    key = jax.random.PRNGKey(0)
    k1, k2 = jax.random.split(key)

    # Typical segmentation use: logits & binary targets, NCHW.
    x = jax.random.normal(k1, (2, 4, 16, 16), dtype=jnp.float32)
    target = (jax.random.uniform(k2, (2, 4, 16, 16)) > 0.5).astype(jnp.float32)

    loss = dice_loss(x, target, smooth=1.0)
    jax.block_until_ready(loss)

    # Reference check (plain JAX).
    s = jax.nn.sigmoid(x).reshape(-1)
    t = target.reshape(-1)
    ref = 1.0 - (2.0 * jnp.sum(s * t) + 1.0) / (jnp.sum(s) + jnp.sum(t) + 1.0)
    assert jnp.allclose(loss, ref, atol=1e-5, rtol=1e-5), (loss, ref)

    print("KERNEL_OK")
</pallas_src>

<mosaic_0001>
module attributes {stable_mosaic.version = 11 : i64} {
  func.func @_dice_sums_kernel(%arg0: i32, %arg1: i32, %arg2: memref<32x128xf32, #tpu.memory_space<vmem>>, %arg3: memref<32x128xf32, #tpu.memory_space<vmem>>, %arg4: memref<1x2x32x128xf32, #tpu.memory_space<vmem>>) attributes {dimension_semantics = [#tpu.dimension_semantics<parallel>, #tpu.dimension_semantics<arbitrary>], iteration_bounds = array<i64: 2, 1>, scalar_prefetch = 0 : i64, scratch_operands = 0 : i64, tpu.core_type = #tpu.core_type<tc>, window_params = [{transform_indices = @transform_0, window_bounds = array<i64: 32, 128>}, {transform_indices = @transform_1, window_bounds = array<i64: 32, 128>}, {transform_indices = @transform_2, window_bounds = array<i64: 1, 2, 32, 128>}]} {
    %c0_i32 = arith.constant 0 : i32
    %0 = arith.cmpi eq, %arg1, %c0_i32 : i32
    %1 = arith.extui %0 : i1 to i32
    %c0_i32_0 = arith.constant 0 : i32
    %2 = arith.cmpi ne, %1, %c0_i32_0 : i32
    scf.if %2 {
      %cst_23 = arith.constant 0.000000e+00 : f32
      %30 = vector.broadcast %cst_23 : f32 to vector<1x2x32x128xf32>
      %c0_24 = arith.constant 0 : index
      %c0_25 = arith.constant 0 : index
      %c0_26 = arith.constant 0 : index
      %c0_27 = arith.constant 0 : index
      %31 = vector.load %arg4[%c0_24, %c0_25, %c0_26, %c0_27] : memref<1x2x32x128xf32, #tpu.memory_space<vmem>>, vector<1x2x32x128xf32>
      tpu.vector_store %arg4[%c0_24, %c0_25, %c0_26, %c0_27], %30 {strides = array<i32>} : memref<1x2x32x128xf32, #tpu.memory_space<vmem>>, vector<1x2x32x128xf32>,
    } else {
    }
    %c0 = arith.constant 0 : index
    %c0_1 = arith.constant 0 : index
    %3 = vector.load %arg2[%c0, %c0_1] : memref<32x128xf32, #tpu.memory_space<vmem>>, vector<32x128xf32>
    %c0_2 = arith.constant 0 : index
    %c0_3 = arith.constant 0 : index
    %4 = vector.load %arg3[%c0_2, %c0_3] : memref<32x128xf32, #tpu.memory_space<vmem>>, vector<32x128xf32>
    %cst = arith.constant 5.000000e-01 : f32
    %5 = vector.broadcast %cst : f32 to vector<32x128xf32>
    %6 = arith.mulf %5, %3 : vector<32x128xf32>
    %7 = math.tanh %6 : vector<32x128xf32>
    %cst_4 = arith.constant 5.000000e-01 : f32
    %8 = vector.broadcast %cst_4 : f32 to vector<32x128xf32>
    %9 = arith.mulf %8, %7 : vector<32x128xf32>
    %cst_5 = arith.constant 5.000000e-01 : f32
    %10 = vector.broadcast %cst_5 : f32 to vector<32x128xf32>
    %11 = arith.addf %9, %10 : vector<32x128xf32>
    %12 = vector.shape_cast %11 : vector<32x128xf32> to vector<1x32x128xf32>
    %13 = vector.shape_cast %4 : vector<32x128xf32> to vector<1x32x128xf32>
    %c0_6 = arith.constant 0 : index
    %c0_7 = arith.constant 0 : index
    %c0_8 = arith.constant 0 : index
    %c0_9 = arith.constant 0 : index
    %14 = vector.load %arg4[%c0_6, %c0_7, %c0_8, %c0_9] : memref<1x2x32x128xf32, #tpu.memory_space<vmem>>, vector<1x1x32x128xf32>
    %15 = vector.shape_cast %14 : vector<1x1x32x128xf32> to vector<32x128xf32>
    %16 = arith.mulf %12, %13 : vector<1x32x128xf32>
    %cst_10 = arith.constant dense<0.000000e+00> : vector<32x128xf32>
    %17 = vector.multi_reduction <add>, %16, %cst_10 [0] : vector<1x32x128xf32> to vector<32x128xf32>
    %18 = arith.addf %15, %17 : vector<32x128xf32>
    %c0_11 = arith.constant 0 : index
    %c0_12 = arith.constant 0 : index
    %c0_13 = arith.constant 0 : index
    %c0_14 = arith.constant 0 : index
    %19 = vector.load %arg4[%c0_11, %c0_12, %c0_13, %c0_14] : memref<1x2x32x128xf32, #tpu.memory_space<vmem>>, vector<1x1x32x128xf32>
    %20 = vector.shape_cast %19 : vector<1x1x32x128xf32> to vector<32x128xf32>
    %21 = vector.shape_cast %18 : vector<32x128xf32> to vector<1x1x32x128xf32>
    tpu.vector_store %arg4[%c0_11, %c0_12, %c0_13, %c0_14], %21 {strides = array<i32>} : memref<1x2x32x128xf32, #tpu.memory_space<vmem>>, vector<1x1x32x128xf32>,
    %c0_15 = arith.constant 0 : index
    %c1 = arith.constant 1 : index
    %c0_16 = arith.constant 0 : index
    %c0_17 = arith.constant 0 : index
    %22 = vector.load %arg4[%c0_15, %c1, %c0_16, %c0_17] : memref<1x2x32x128xf32, #tpu.memory_space<vmem>>, vector<1x1x32x128xf32>
    %23 = vector.shape_cast %22 : vector<1x1x32x128xf32> to vector<32x128xf32>
    %24 = arith.addf %12, %13 : vector<1x32x128xf32>
    %cst_18 = arith.constant dense<0.000000e+00> : vector<32x128xf32>
    %25 = vector.multi_reduction <add>, %24, %cst_18 [0] : vector<1x32x128xf32> to vector<32x128xf32>
    %26 = arith.addf %23, %25 : vector<32x128xf32>
    %c0_19 = arith.constant 0 : index
    %c1_20 = arith.constant 1 : index
    %c0_21 = arith.constant 0 : index
    %c0_22 = arith.constant 0 : index
    %27 = vector.load %arg4[%c0_19, %c1_20, %c0_21, %c0_22] : memref<1x2x32x128xf32, #tpu.memory_space<vmem>>, vector<1x1x32x128xf32>
    %28 = vector.shape_cast %27 : vector<1x1x32x128xf32> to vector<32x128xf32>
    %29 = vector.shape_cast %26 : vector<32x128xf32> to vector<1x1x32x128xf32>
    tpu.vector_store %arg4[%c0_19, %c1_20, %c0_21, %c0_22], %29 {strides = array<i32>} : memref<1x2x32x128xf32, #tpu.memory_space<vmem>>, vector<1x1x32x128xf32>,
    return
  }
  func.func @transform_0(%arg0: i32, %arg1: i32) -> (i32, i32) {
    %c1_i32 = arith.constant 1 : i32
    %0 = arith.muli %arg0, %c1_i32 : i32
    %1 = arith.addi %0, %arg1 : i32
    %c0_i32 = arith.constant 0 : i32
    %c0_i32_0 = arith.constant 0 : i32
    return %1, %c0_i32 : i32, i32
  }
  func.func @transform_1(%arg0: i32, %arg1: i32) -> (i32, i32) {
    %c1_i32 = arith.constant 1 : i32
    %0 = arith.muli %arg0, %c1_i32 : i32
    %1 = arith.addi %0, %arg1 : i32
    %c0_i32 = arith.constant 0 : i32
    %c0_i32_0 = arith.constant 0 : i32
    return %1, %c0_i32 : i32, i32
  }
  func.func @transform_2(%arg0: i32, %arg1: i32) -> (i32, i32, i32, i32) {
    %c0_i32 = arith.constant 0 : i32
    %c0_i32_0 = arith.constant 0 : i32
    %c0_i32_1 = arith.constant 0 : i32
    %c0_i32_2 = arith.constant 0 : i32
    return %arg0, %c0_i32, %c0_i32_0, %c0_i32_1 : i32, i32, i32, i32
  }
}

</mosaic_0001>

<llo_original>
// kernel: tpu_custom_call.1
$region0: #{tpu_custom_call.1}
  #allocation0 [shape = 'u32[]', space=smem, size = 0x4, offset = 0x4, fixed_abs, tag = 'smem constant byte address 0x4 - core index']
  #allocation1 [shape = 'u32[144,128]{1,0:T(1,128)}', space=vmem, size = 0x12000, scoped, tag = 'internal scratch']
  %s0 = inlined_call_operand.hbm [shape: f32[64,128], index: 0, kind: input, shape index: {}]
  %s1 = inlined_call_operand.hbm [shape: f32[64,128], index: 1, kind: input, shape index: {}]
  %s2 = inlined_call_operand.hbm [shape: f32[2,2,32,128], index: 2, kind: output, shape index: {}]
  %s3 = sld [smem:[#allocation0]]
  $region53: #{tpu_custom_call.1} parent=0
    _
  %s5 = ssub.s32 1, %s3
  %s6 = scalar_select 0, %s5, %s3
  $region1: #{tpu_custom_call.1} parent=0
    #allocation2 [shape = 'u8[32768]{0}', space=vmem, size = 0x8000, scoped, tag = 'input window, operand 0']
    #allocation3 [shape = 's32[2]{0}', space=sflag, size = 0x8, scoped, tag = 'scoped memory for tpu_custom_call.1']
    #allocation4 [shape = 's32[2]{0}', space=sflag, size = 0x8, scoped, tag = 'scoped memory for tpu_custom_call.1']
    #allocation5 [shape = 'u8[32768]{0}', space=vmem, size = 0x8000, scoped, tag = 'input window, operand 1']
    #allocation6 [shape = 's32[2]{0}', space=sflag, size = 0x8, scoped, tag = 'scoped memory for tpu_custom_call.1']
    #allocation7 [shape = 'u8[65536]{0}', space=vmem, size = 0x10000, scoped, tag = 'output window, operand 0']
    %7 = vsyncpa [#allocation3], 0
    %s8 = scalar_lea.sflag [#allocation3], 1
    %9 = vsyncpa %s8, 0
    %10 = vsyncpa [#allocation6], 0
    %s11 = scalar_lea.sflag [#allocation6], 1
    %12 = vsyncpa %s11, 0
    %13 = vsyncpa [#allocation4], 0
    %s14 = scalar_lea.sflag [#allocation4], 1
    %15 = vsyncpa %s14, 0
    loop: start=0, step=1, limit=4
    $region2: #{tpu_custom_call.1} parent=1 // loop_pre_header
      _
    $region3: #{tpu_custom_call.1} parent=1 // loop_header
      %s17 = sphi 0, %s21
      %p18 = scmp.ge.s32.totalorder %s17, 4
      %s24 = sphi 0, %s36
      %s25 = sphi 0, %s32
      %s26 = sphi 0, %s24
      %s27 = sphi 0, %s25
      %s28 = sphi 0, %s26
      %s29 = sphi 0, %s27
      %s41 = sphi 0, %s43
      %s44 = sphi 0, %s41
      %s45 = sphi 0, %s44
      %s61 = sphi 0, %s45
      %s69 = sphi 0, %s71
      %s72 = sphi 0, %s69
      %s73 = sphi 0, %s72
      %s89 = sphi 0, %s73
      %s95 = sphi 0, %s97
      %s98 = sphi 0, %s95
      %s99 = sphi 0, %s98
      %s115 = sphi 0, %s99
    $region4: #{tpu_custom_call.1} parent=1 // loop_header_branch
      %20 = sbr.rel (%p18) target = $region8
    $region5: #{tpu_custom_call.1} parent=1 // loop_body
      %s22 = ssub.s32 %s17, 1
      %s23 = ssub.s32 %s17, 2
      %s30 = sadd.s32 1, %s25
      %p31 = scmp.ge.s32.totalorder %s30, 1
      %s32 = scalar_select %p31, 0, %s30
      %s33 = sadd.s32 1, %s24
      %s34 = scalar_select %p31, %s33, %s24
      %p35 = scmp.ge.s32.totalorder %s34, 2
      %s36 = scalar_select %p35, 0, %s34
      %s37 = sadd.s32 %s24, %s25
      %s38 = sadd.s32 %s36, %s32
      %s39 = ssub.s32 %s37, %s38
      %p40 = scmp.eq.s32.totalorder %s39, 0
      %s42 = sadd.s32 %s41, 1
      %s43 = scalar_select %p40, %s41, %s42
      %p46 = pneg %p40
      %p47 = scmp.eq.s32.totalorder %s17, 1
      %p48 = por %p46, %p47
      %p49 = scmp.ne.s32.totalorder %s41, %s44
      %p50 = scmp.eq.s32.totalorder %s17, 0
      %p51 = por %p49, %p50
      %p52 = scmp.ne.s32.totalorder %s41, %s44
      %p53 = scmp.eq.s32.totalorder %s22, 1
      %p54 = por %p52, %p53
      %p55 = scmp.ne.s32.totalorder %s44, %s45
      %p56 = scmp.eq.s32.totalorder %s22, 0
      %p57 = por %p55, %p56
      %p58 = scmp.ne.s32.totalorder %s44, %s45
      %p59 = scmp.eq.s32.totalorder %s23, 1
      %p60 = por %p58, %p59
      %p62 = scmp.ne.s32.totalorder %s45, %s61
      %p63 = scmp.eq.s32.totalorder %s23, 0
      %p64 = por %p62, %p63
      %s65 = sadd.s32 %s24, %s25
      %s66 = sadd.s32 %s36, %s32
      %s67 = ssub.s32 %s65, %s66
      %p68 = scmp.eq.s32.totalorder %s67, 0
      %s70 = sadd.s32 %s69, 1
      %s71 = scalar_select %p68, %s69, %s70
      %p74 = pneg %p68
      %p75 = scmp.eq.s32.totalorder %s17, 1
      %p76 = por %p74, %p75
      %p77 = scmp.ne.s32.totalorder %s69, %s72
      %p78 = scmp.eq.s32.totalorder %s17, 0
      %p79 = por %p77, %p78
      %p80 = scmp.ne.s32.totalorder %s69, %s72
      %p81 = scmp.eq.s32.totalorder %s22, 1
      %p82 = por %p80, %p81
      %p83 = scmp.ne.s32.totalorder %s72, %s73
      %p84 = scmp.eq.s32.totalorder %s22, 0
      %p85 = por %p83, %p84
      %p86 = scmp.ne.s32.totalorder %s72, %s73
      %p87 = scmp.eq.s32.totalorder %s23, 1
      %p88 = por %p86, %p87
      %p90 = scmp.ne.s32.totalorder %s73, %s89
      %p91 = scmp.eq.s32.totalorder %s23, 0
      %p92 = por %p90, %p91
      %s93 = ssub.s32 %s24, %s36
      %p94 = scmp.eq.s32.totalorder %s93, 0
      %s96 = sadd.s32 %s95, 1
      %s97 = scalar_select %p94, %s95, %s96
      %p100 = pneg %p94
      %p101 = scmp.eq.s32.totalorder %s17, 1
      %p102 = por %p100, %p101
      %p103 = scmp.ne.s32.totalorder %s95, %s98
      %p104 = scmp.eq.s32.totalorder %s17, 0
      %p105 = por %p103, %p104
      %p106 = scmp.ne.s32.totalorder %s95, %s98
      %p107 = scmp.eq.s32.totalorder %s22, 1
      %p108 = por %p106, %p107
      %p109 = scmp.ne.s32.totalorder %s98, %s99
      %p110 = scmp.eq.s32.totalorder %s22, 0
      %p111 = por %p109, %p110
      %p112 = scmp.ne.s32.totalorder %s98, %s99
      %p113 = scmp.eq.s32.totalorder %s23, 1
      %p114 = por %p112, %p113
      %p116 = scmp.ne.s32.totalorder %s99, %s115
      %p117 = scmp.eq.s32.totalorder %s23, 0
      %p118 = por %p116, %p117
      %p119 = scmp.le.s32.totalorder 1, %s17
      %p120 = scmp.lt.s32.totalorder %s17, 3
      %p121 = pnand %p119, %p120
      %p122 = pneg %p121
      // Predicated region
      $region9: #{tpu_custom_call.1} parent=5 // pred_check
        _
      $region10: #{tpu_custom_call.1} parent=5 // pred_check_branch
        %124 = sbr.rel (%p121) target = $region12
      $region11: #{tpu_custom_call.1} parent=5 // pred_region
        %s125 = ssub.s32 %s17, 1
      $region12: #{tpu_custom_call.1} parent=5 // pred_fallthru
        _
      %p126 = scmp.lt.s32.totalorder %s17, 2
      // Predicated region
      $region13: #{tpu_custom_call.1} parent=5 // pred_check
        %p127 = pneg %p126
      $region14: #{tpu_custom_call.1} parent=5 // pred_check_branch
        %129 = sbr.rel (%p127) target = $region16
      $region15: #{tpu_custom_call.1} parent=5 // pred_region
        // Predicated region
        $region17: #{tpu_custom_call.1} parent=15 // pred_check
          %p130 = pneg %p51
        $region18: #{tpu_custom_call.1} parent=15 // pred_check_branch
          %132 = sbr.rel (%p130) target = $region20
        $region19: #{tpu_custom_call.1} parent=15 // pred_region
          %s133 = sand.u32 %s41, 1
          %s134 = scalar_lea.sflag [#allocation3], %s133
          %s135 = sand.u32 %s41, 1
          %s136 = smul.addr %s135, 32
          %s137 = scalar_lea.vmem [#allocation2], %s136
          %s138 = sadd.s32 %s24, %s25
          %s139 = smul.u32 4, %s138
          %s141 = ssub.s32 512, 512
          %142 = vsyncadd %s134, %s141
          %s143 = smul.addr %s139, 128
          %s144 = scalar_lea.hbm %s0, %s143
          %s145 = sshll.u32 %s137, 4
          %s146 = int_to_ptr.vmem [resolvable:$true] %s145
          %151 = dma.hbm_to_vmem [thread:$0]  %s144, 512, %s146, %s134, 128, 128, 8
        $region20: #{tpu_custom_call.1} parent=15 // pred_fallthru
          _
        // Predicated region
        $region21: #{tpu_custom_call.1} parent=15 // pred_check
          %p152 = pneg %p79
        $region22: #{tpu_custom_call.1} parent=15 // pred_check_branch
          %154 = sbr.rel (%p152) target = $region24
        $region23: #{tpu_custom_call.1} parent=15 // pred_region
          %s155 = sand.u32 %s69, 1
          %s156 = scalar_lea.sflag [#allocation6], %s155
          %s157 = sand.u32 %s69, 1
          %s158 = smul.addr %s157, 32
          %s159 = scalar_lea.vmem [#allocation5], %s158
          %s160 = sadd.s32 %s24, %s25
          %s161 = smul.u32 4, %s160
          %s163 = ssub.s32 512, 512
          %164 = vsyncadd %s156, %s163
          %s165 = smul.addr %s161, 128
          %s166 = scalar_lea.hbm %s1, %s165
          %s167 = sshll.u32 %s159, 4
          %s168 = int_to_ptr.vmem [resolvable:$true] %s167
          %173 = dma.hbm_to_vmem [thread:$0]  %s166, 512, %s168, %s156, 128, 128, 8
        $region24: #{tpu_custom_call.1} parent=15 // pred_fallthru
          _
      $region16: #{tpu_custom_call.1} parent=5 // pred_fallthru
        _
      %p174 = scmp.le.s32.totalorder 1, %s17
      %p175 = scmp.lt.s32.totalorder %s17, 3
      %p176 = pnand %p174, %p175
      %p177 = pneg %p176
      // Predicated region
      $region25: #{tpu_custom_call.1} parent=5 // pred_check
        _
      $region26: #{tpu_custom_call.1} parent=5 // pred_check_branch
        %179 = sbr.rel (%p176) target = $region28
      $region27: #{tpu_custom_call.1} parent=5 // pred_region
        %s180 = ssub.s32 %s17, 1
        %s181 = sand.u32 %s44, 1
        %s182 = scalar_lea.sflag [#allocation3], %s181
        %s183 = sand.u32 %s44, 1
        %s184 = smul.addr %s183, 32
        %s185 = scalar_lea.vmem [#allocation2], %s184
        // Predicated region
        $region29: #{tpu_custom_call.1} parent=27 // pred_check
          %p186 = pneg %p57
        $region30: #{tpu_custom_call.1} parent=27 // pred_check_branch
          %188 = sbr.rel (%p186) target = $region32
        $region31: #{tpu_custom_call.1} parent=27 // pred_region
          %189 = dma.done %s182, 512
        $region32: #{tpu_custom_call.1} parent=27 // pred_fallthru
          _
        %s190 = sand.u32 %s72, 1
        %s191 = scalar_lea.sflag [#allocation6], %s190
        %s192 = sand.u32 %s72, 1
        %s193 = smul.addr %s192, 32
        %s194 = scalar_lea.vmem [#allocation5], %s193
        // Predicated region
        $region33: #{tpu_custom_call.1} parent=27 // pred_check
          %p195 = pneg %p85
        $region34: #{tpu_custom_call.1} parent=27 // pred_check_branch
          %197 = sbr.rel (%p195) target = $region36
        $region35: #{tpu_custom_call.1} parent=27 // pred_region
          %198 = dma.done %s191, 512
        $region36: #{tpu_custom_call.1} parent=27 // pred_fallthru
          _
        %s199 = sand.u32 %s44, 1
        %s200 = scalar_lea.sflag [#allocation3], %s199
        %s201 = sand.u32 %s44, 1
        %s202 = smul.addr %s201, 32
        %s203 = scalar_lea.vmem [#allocation2], %s202
        %p204 = pneg %p57
        %p205 = pneg %p54
        %s206 = sand.u32 %s72, 1
        %s207 = scalar_lea.sflag [#allocation6], %s206
        %s208 = sand.u32 %s72, 1
        %s209 = smul.addr %s208, 32
        %s210 = scalar_lea.vmem [#allocation5], %s209
        %p211 = pneg %p85
        %p212 = pneg %p82
        %p213 = pneg %p111
        %p214 = pneg %p108
        %s215 = sand.u32 %s98, 1
        %s216 = scalar_lea.sflag [#allocation4], %s215
        %s217 = sand.u32 %s98, 1
        %s218 = smul.addr %s217, 64
        %s219 = scalar_lea.vmem [#allocation7], %s218
        %s220 = sadd.s32 %s26, %s27
        %s221 = smul.u32 4, %s220
        %s222 = sadd.s32 %s26, %s27
        %s223 = smul.u32 4, %s222
        %p224 = scmp.eq.s32.totalorder %s27, 0
        // Predicated region
        $region37: #{tpu_custom_call.1} parent=27 // pred_check
          %p225 = pneg %p224
        $region38: #{tpu_custom_call.1} parent=27 // pred_check_branch
          %227 = sbr.rel (%p225) target = $region40
        $region39: #{tpu_custom_call.1} parent=27 // pred_region
          %228 = vst [vmem:[%s219] sm:$0xff] 0.0
          %229 = vst [vmem:[%s219 + $0x8] sm:$0xff] 0.0
          %230 = vst [vmem:[%s219 + $0x10] sm:$0xff] 0.0
          %231 = vst [vmem:[%s219 + $0x18] sm:$0xff] 0.0
          %232 = vst [vmem:[%s219 + $0x20] sm:$0xff] 0.0
          %233 = vst [vmem:[%s219 + $0x28] sm:$0xff] 0.0
          %234 = vst [vmem:[%s219 + $0x30] sm:$0xff] 0.0
          %235 = vst [vmem:[%s219 + $0x38] sm:$0xff] 0.0
        $region40: #{tpu_custom_call.1} parent=27 // pred_fallthru
          _
        %v236 = vld [vmem:[%s185] sm:$0xff]
        %v237 = vld [vmem:[%s185 + $0x8] sm:$0xff]
        %v238 = vld [vmem:[%s185 + $0x10] sm:$0xff]
        %v239 = vld [vmem:[%s185 + $0x18] sm:$0xff]
        %v240 = vld [vmem:[%s194] sm:$0xff]
        %v241 = vld [vmem:[%s194 + $0x8] sm:$0xff]
        %v242 = vld [vmem:[%s194 + $0x10] sm:$0xff]
        %v243 = vld [vmem:[%s194 + $0x18] sm:$0xff]
        %v244 = vmul.f32 %v236, 0.5
        %v245 = vmul.f32 %v237, 0.5
        %v246 = vmul.f32 %v238, 0.5
        %v247 = vmul.f32 %v239, 0.5
        %v248 = vtanh.pop %v244
        %v249 = vtanh.pop %v245
        %v250 = vtanh.pop %v246
        %v251 = vtanh.pop %v247
        %v252 = vmul.f32 %v248, 0.5
        %v253 = vmul.f32 %v249, 0.5
        %v254 = vmul.f32 %v250, 0.5
        %v255 = vmul.f32 %v251, 0.5
        %v256 = vadd.f32 %v252, 0.5
        %v257 = vadd.f32 %v253, 0.5
        %v258 = vadd.f32 %v254, 0.5
        %v259 = vadd.f32 %v255, 0.5
        %v260 = vld [vmem:[%s219] sm:$0xff]
        %v261 = vld [vmem:[%s219 + $0x8] sm:$0xff]
        %v262 = vld [vmem:[%s219 + $0x10] sm:$0xff]
        %v263 = vld [vmem:[%s219 + $0x18] sm:$0xff]
        %v264 = vmul.f32 %v256, %v240
        %v265 = vmul.f32 %v257, %v241
        %v266 = vmul.f32 %v258, %v242
        %v267 = vmul.f32 %v259, %v243
        %v268 = vadd.f32 %v264, 0.0
        %v269 = vadd.f32 %v265, 0.0
        %v270 = vadd.f32 %v266, 0.0
        %v271 = vadd.f32 %v267, 0.0
        %v272 = vadd.f32 %v260, %v268
        %v273 = vadd.f32 %v261, %v269
        %v274 = vadd.f32 %v262, %v270
        %v275 = vadd.f32 %v263, %v271
        %276 = vst [vmem:[%s219] sm:$0xff] %v272
        %277 = vst [vmem:[%s219 + $0x8] sm:$0xff] %v273
        %278 = vst [vmem:[%s219 + $0x10] sm:$0xff] %v274
        %279 = vst [vmem:[%s219 + $0x18] sm:$0xff] %v275
        %s280 = scalar_lea.vmem %s219, 32 [#allocation7]
        %v281 = vld [vmem:[%s280] sm:$0xff]
        %v282 = vld [vmem:[%s280 + $0x8] sm:$0xff]
        %v283 = vld [vmem:[%s280 + $0x10] sm:$0xff]
        %v284 = vld [vmem:[%s280 + $0x18] sm:$0xff]
        %v285 = vadd.f32 %v256, %v240
        %v286 = vadd.f32 %v257, %v241
        %v287 = vadd.f32 %v258, %v242
        %v288 = vadd.f32 %v259, %v243
        %v289 = vadd.f32 %v285, 0.0
        %v290 = vadd.f32 %v286, 0.0
        %v291 = vadd.f32 %v287, 0.0
        %v292 = vadd.f32 %v288, 0.0
        %v293 = vadd.f32 %v281, %v289
        %v294 = vadd.f32 %v282, %v290
        %v295 = vadd.f32 %v283, %v291
        %v296 = vadd.f32 %v284, %v292
        %297 = vst [vmem:[%s280] sm:$0xff] %v293
        %298 = vst [vmem:[%s280 + $0x8] sm:$0xff] %v294
        %299 = vst [vmem:[%s280 + $0x10] sm:$0xff] %v295
        %300 = vst [vmem:[%s280 + $0x18] sm:$0xff] %v296
        %s301 = sand.u32 %s98, 1
        %s302 = scalar_lea.sflag [#allocation4], %s301
        %s303 = sand.u32 %s98, 1
        %s304 = smul.addr %s303, 64
        %s305 = scalar_lea.vmem [#allocation7], %s304
        // Predicated region
        $region41: #{tpu_custom_call.1} parent=27 // pred_check
          %p306 = pneg %p108
        $region42: #{tpu_custom_call.1} parent=27 // pred_check_branch
          %308 = sbr.rel (%p306) target = $region44
        $region43: #{tpu_custom_call.1} parent=27 // pred_region
          %s310 = ssub.s32 1024, 1024
          %311 = vsyncadd %s302, %s310
          %s312 = smul.addr %s26, 8
          %s313 = smul.addr %s312, 128
          %s314 = scalar_lea.hbm %s2, %s313
          %s315 = sshll.u32 %s305, 4
          %s316 = int_to_ptr.vmem [resolvable:$true] %s315
          %321 = dma.vmem_to_hbm [thread:$0]  %s316, 1024, %s314, %s302, 128, 128, 8
        $region44: #{tpu_custom_call.1} parent=27 // pred_fallthru
          _
      $region28: #{tpu_custom_call.1} parent=5 // pred_fallthru
        _
      %p322 = scmp.le.s32.totalorder 2, %s17
      // Predicated region
      $region45: #{tpu_custom_call.1} parent=5 // pred_check
        %p323 = pneg %p322
      $region46: #{tpu_custom_call.1} parent=5 // pred_check_branch
        %325 = sbr.rel (%p323) target = $region48
      $region47: #{tpu_custom_call.1} parent=5 // pred_region
        %s326 = ssub.s32 %s17, 2
        // Predicated region
        $region49: #{tpu_custom_call.1} parent=47 // pred_check
          %p327 = pneg %p114
        $region50: #{tpu_custom_call.1} parent=47 // pred_check_branch
          %329 = sbr.rel (%p327) target = $region52
        $region51: #{tpu_custom_call.1} parent=47 // pred_region
          %s330 = sand.u32 %s99, 1
          %s331 = scalar_lea.sflag [#allocation4], %s330
          %s332 = sand.u32 %s99, 1
          %s333 = smul.addr %s332, 64
          %s334 = scalar_lea.vmem [#allocation7], %s333
          %335 = dma.done %s331, 1024
        $region52: #{tpu_custom_call.1} parent=47 // pred_fallthru
          _
      $region48: #{tpu_custom_call.1} parent=5 // pred_fallthru
        _
    $region6: #{tpu_custom_call.1} parent=1 // loop_footer
      %s21 = sadd.s32 1, %s17
    $region7: #{tpu_custom_call.1} parent=1 // loop_footer_branch
      %16 = sbr.rel target = $region3
    $region8: #{tpu_custom_call.1} parent=1 // loop_exit
      _
    %336 = vsyncpa [#allocation3], 1
    %s337 = scalar_lea.sflag [#allocation3], 1
    %338 = vsyncpa %s337, 1
    %339 = vsyncpa [#allocation6], 1
    %s340 = scalar_lea.sflag [#allocation6], 1
    %341 = vsyncpa %s340, 1
    %342 = vsyncpa [#allocation4], 1
    %s343 = scalar_lea.sflag [#allocation4], 1
    %344 = vsyncpa %s343, 1

</llo_original>
